<compile_context>
chip_gen: v6e
topology: v6e:2x2x1
jax: 0.10.0
libtpu: 0.0.40
codegen_flags: <defaults>
</compile_context>

<pallas_src>
import functools

import jax
import jax.numpy as jnp
from jax.experimental import pallas as pl
from jax.experimental.pallas import tpu as pltpu

ESP = 1e-08
LANES = 128
SUBLANES = 8


def _fidelity_kernel(p_ref, g_ref, out_ref, acc_ref, *, n_valid, tile_rows,
                     tiles_per_split):
    c = pl.program_id(0)          # "parallel" split axis (megacore on v7x)
    i = pl.program_id(1)          # sequential reduction over this split's tiles

    @pl.when(i == 0)
    def _():
        acc_ref[...] = jnp.zeros_like(acc_ref)

    p = p_ref[...].astype(jnp.float32)
    g = g_ref[...].astype(jnp.float32)

    # 1 - ( sqrt(p*g + eps) + sqrt((1-p)*(1-g) + eps) ), elementwise (VPU + EUP).
    f = 1.0 - (jnp.sqrt(p * g + ESP) + jnp.sqrt((1.0 - p) * (1.0 - g) + ESP))

    # Validity mask: covers (a) the <=1023-element pad to the 8x128 boundary,
    # (b) the ragged portion of the last real tile, and (c) clamped duplicate
    # tiles of the last split.  Uses the *unclamped* tile index.
    tile_idx = c * tiles_per_split + i
    row = jax.lax.broadcasted_iota(jnp.int32, (tile_rows, LANES), 0)
    lane = jax.lax.broadcasted_iota(jnp.int32, (tile_rows, LANES), 1)
    flat_idx = (tile_idx * tile_rows + row) * LANES + lane

    # Pure elementwise accumulate into VMEM scratch (no per-step XLU reduce).
    acc_ref[...] += jnp.where(flat_idx < n_valid, f, 0.0)

    # Single cheap sublane reduce per split -> tiny lane-dense partial output.
    @pl.when(i == pl.num_programs(1) - 1)
    def _():
        out_ref[...] = jnp.sum(acc_ref[...], axis=0, keepdims=True)


def multi_fidelity_loss(p, g, *, tile_rows=512, num_splits=2):
    """p, g: same-shaped (batch, num_outputs) arrays. Returns scalar f32 loss."""
    assert p.shape == g.shape
    n = int(p.size)
    assert n > 0

    # Flatten to a lane-dense (rows, 128) slab; pad only to the 8x128 boundary.
    chunk = SUBLANES * LANES                       # 1024 elements
    padded_n = int(pl.cdiv(n, chunk)) * chunk
    pad = padded_n - n
    rows = padded_n // LANES                       # multiple of 8

    p_flat = jnp.ravel(p)
    g_flat = jnp.ravel(g)
    if pad:
        p_flat = jnp.pad(p_flat, (0, pad))
        g_flat = jnp.pad(g_flat, (0, pad))
    p_flat = p_flat.reshape(rows, LANES)
    g_flat = g_flat.reshape(rows, LANES)

    # Tile sizing: biggest tile that fits, multiple of 8 sublanes, <= rows.
    tile_rows = int(max(SUBLANES, min(int(tile_rows), rows)))
    tile_rows = int(pl.cdiv(tile_rows, SUBLANES)) * SUBLANES

    total_tiles = int(pl.cdiv(rows, tile_rows))
    num_splits = int(max(1, min(int(num_splits), total_tiles)))
    tiles_per_split = int(pl.cdiv(total_tiles, num_splits))
    last_tile = total_tiles - 1

    def in_index_map(c, i):
        # Clamp so the last split never indexes a fully out-of-bounds block;
        # the in-kernel mask zeroes the duplicated contribution.
        return (jnp.minimum(c * tiles_per_split + i, last_tile), 0)

    in_spec = pl.BlockSpec((tile_rows, LANES), in_index_map)

    kernel = functools.partial(
        _fidelity_kernel, n_valid=n, tile_rows=tile_rows,
        tiles_per_split=tiles_per_split)

    in_bytes = (jnp.dtype(p_flat.dtype).itemsize
                + jnp.dtype(g_flat.dtype).itemsize)
    cost = pl.CostEstimate(
        flops=9 * n,
        transcendentals=2 * n,
        bytes_accessed=in_bytes * padded_n + 4 * num_splits * LANES,
    )

    partials = pl.pallas_call(
        kernel,
        out_shape=jax.ShapeDtypeStruct((num_splits, 1, LANES), jnp.float32),
        grid_spec=pltpu.PrefetchScalarGridSpec(
            num_scalar_prefetch=0,
            grid=(num_splits, tiles_per_split),
            in_specs=[in_spec, in_spec],
            out_specs=pl.BlockSpec((None, 1, LANES), lambda c, i: (c, 0, 0)),
            scratch_shapes=[pltpu.VMEM((tile_rows, LANES), jnp.float32)],
        ),
        compiler_params=pltpu.CompilerParams(
            dimension_semantics=("parallel", "arbitrary"),
        ),
        cost_estimate=cost,
    )(p_flat, g_flat)

    # Final reduce of 2*128 partials is trivial.
    return jnp.sum(partials) * (1.0 / n)


def _reference(p, g):
    p = p.astype(jnp.float32)
    g = g.astype(jnp.float32)
    f = 1.0 - (jnp.sqrt(p * g + ESP) + jnp.sqrt((1.0 - p) * (1.0 - g) + ESP))
    return jnp.mean(f)


if __name__ == "__main__":
    key = jax.random.PRNGKey(0)
    # (16, 8): toy shape from the module; (96, 37): sub-chunk pad + masking;
    # (512, 384): aligned multi-tile, 2-way core split, no wrapper pad;
    # (1000, 173): ragged edge tile + clamped duplicate tile in the last split.
    for (B, C) in [(16, 8), (96, 37), (512, 384), (1000, 173)]:
        key, kp, kg = jax.random.split(key, 3)
        p = jax.nn.sigmoid(jax.random.normal(kp, (B, C), dtype=jnp.float32))
        g = jax.nn.sigmoid(jax.random.normal(kg, (B, C), dtype=jnp.float32))

        loss = jax.block_until_ready(multi_fidelity_loss(p, g))
        ref = _reference(p, g)
        assert jnp.allclose(loss, ref, atol=1e-5, rtol=1e-5), (B, C, loss, ref)

    print("KERNEL_OK")
</pallas_src>

<mosaic_0001>
module attributes {stable_mosaic.version = 11 : i64} {
  func.func @_fidelity_kernel(%arg0: i32, %arg1: i32, %arg2: memref<8x128xf32, #tpu.memory_space<vmem>>, %arg3: memref<8x128xf32, #tpu.memory_space<vmem>>, %arg4: memref<1x1x128xf32, #tpu.memory_space<vmem>>, %arg5: memref<8x128xf32, #tpu.memory_space<vmem>>) attributes {dimension_semantics = [#tpu.dimension_semantics<parallel>, #tpu.dimension_semantics<arbitrary>], iteration_bounds = array<i64: 1, 1>, scalar_prefetch = 0 : i64, scratch_operands = 1 : i64, tpu.core_type = #tpu.core_type<tc>, window_params = [{transform_indices = @transform_0, window_bounds = array<i64: 8, 128>}, {transform_indices = @transform_1, window_bounds = array<i64: 8, 128>}, {transform_indices = @transform_2, window_bounds = array<i64: 1, 1, 128>}]} {
    %c0_i32 = arith.constant 0 : i32
    %0 = arith.cmpi eq, %arg1, %c0_i32 : i32
    %1 = arith.extui %0 : i1 to i32
    %c0_i32_0 = arith.constant 0 : i32
    %2 = arith.cmpi ne, %1, %c0_i32_0 : i32
    scf.if %2 {
      %cst_16 = arith.constant 0.000000e+00 : f32
      %40 = vector.broadcast %cst_16 : f32 to vector<8x128xf32>
      %c0_17 = arith.constant 0 : index
      %c0_18 = arith.constant 0 : index
      %41 = vector.load %arg5[%c0_17, %c0_18] : memref<8x128xf32, #tpu.memory_space<vmem>>, vector<8x128xf32>
      tpu.vector_store %arg5[%c0_17, %c0_18], %40 {strides = array<i32>} : memref<8x128xf32, #tpu.memory_space<vmem>>, vector<8x128xf32>,
    } else {
    }
    %c0 = arith.constant 0 : index
    %c0_1 = arith.constant 0 : index
    %3 = vector.load %arg2[%c0, %c0_1] : memref<8x128xf32, #tpu.memory_space<vmem>>, vector<8x128xf32>
    %c0_2 = arith.constant 0 : index
    %c0_3 = arith.constant 0 : index
    %4 = vector.load %arg3[%c0_2, %c0_3] : memref<8x128xf32, #tpu.memory_space<vmem>>, vector<8x128xf32>
    %5 = arith.mulf %3, %4 : vector<8x128xf32>
    %cst = arith.constant 9.99999993E-9 : f32
    %6 = vector.broadcast %cst : f32 to vector<8x128xf32>
    %7 = arith.addf %5, %6 : vector<8x128xf32>
    %8 = math.sqrt %7 : vector<8x128xf32>
    %cst_4 = arith.constant 1.000000e+00 : f32
    %9 = vector.broadcast %cst_4 : f32 to vector<8x128xf32>
    %10 = arith.subf %9, %3 : vector<8x128xf32>
    %cst_5 = arith.constant 1.000000e+00 : f32
    %11 = vector.broadcast %cst_5 : f32 to vector<8x128xf32>
    %12 = arith.subf %11, %4 : vector<8x128xf32>
    %13 = arith.mulf %10, %12 : vector<8x128xf32>
    %cst_6 = arith.constant 9.99999993E-9 : f32
    %14 = vector.broadcast %cst_6 : f32 to vector<8x128xf32>
    %15 = arith.addf %13, %14 : vector<8x128xf32>
    %16 = math.sqrt %15 : vector<8x128xf32>
    %17 = arith.addf %8, %16 : vector<8x128xf32>
    %cst_7 = arith.constant 1.000000e+00 : f32
    %18 = vector.broadcast %cst_7 : f32 to vector<8x128xf32>
    %19 = arith.subf %18, %17 : vector<8x128xf32>
    %c1_i32 = arith.constant 1 : i32
    %20 = arith.muli %arg0, %c1_i32 : i32
    %21 = arith.addi %20, %arg1 : i32
    %22 = tpu.iota {dimensions = array<i32: 0>} : vector<8x128xi32>
    %23 = tpu.iota {dimensions = array<i32: 1>} : vector<8x128xi32>
    %c8_i32 = arith.constant 8 : i32
    %24 = arith.muli %21, %c8_i32 : i32
    %25 = vector.broadcast %24 : i32 to vector<8x128xi32>
    %26 = arith.addi %25, %22 : vector<8x128xi32>
    %c128_i32 = arith.constant 128 : i32
    %27 = vector.broadcast %c128_i32 : i32 to vector<8x128xi32>
    %28 = arith.muli %26, %27 : vector<8x128xi32>
    %29 = arith.addi %28, %23 : vector<8x128xi32>
    %c0_8 = arith.constant 0 : index
    %c0_9 = arith.constant 0 : index
    %30 = vector.load %arg5[%c0_8, %c0_9] : memref<8x128xf32, #tpu.memory_space<vmem>>, vector<8x128xf32>
    %c128_i32_10 = arith.constant 128 : i32
    %31 = vector.broadcast %c128_i32_10 : i32 to vector<8x128xi32>
    %32 = arith.cmpi slt, %29, %31 : vector<8x128xi32>
    %cst_11 = arith.constant 0.000000e+00 : f32
    %33 = vector.broadcast %cst_11 : f32 to vector<8x128xf32>
    %34 = arith.select %32, %19, %33 : vector<8x128xi1>, vector<8x128xf32>
    %35 = arith.addf %30, %34 : vector<8x128xf32>
    %c0_12 = arith.constant 0 : index
    %c0_13 = arith.constant 0 : index
    %36 = vector.load %arg5[%c0_12, %c0_13] : memref<8x128xf32, #tpu.memory_space<vmem>>, vector<8x128xf32>
    tpu.vector_store %arg5[%c0_12, %c0_13], %35 {strides = array<i32>} : memref<8x128xf32, #tpu.memory_space<vmem>>, vector<8x128xf32>,
    %c0_i32_14 = arith.constant 0 : i32
    %37 = arith.cmpi eq, %arg1, %c0_i32_14 : i32
    %38 = arith.extui %37 : i1 to i32
    %c0_i32_15 = arith.constant 0 : i32
    %39 = arith.cmpi ne, %38, %c0_i32_15 : i32
    scf.if %39 {
      %c0_16 = arith.constant 0 : index
      %c0_17 = arith.constant 0 : index
      %40 = vector.load %arg5[%c0_16, %c0_17] : memref<8x128xf32, #tpu.memory_space<vmem>>, vector<8x128xf32>
      %cst_18 = arith.constant dense<0.000000e+00> : vector<128xf32>
      %41 = vector.multi_reduction <add>, %40, %cst_18 [0] : vector<8x128xf32> to vector<128xf32>
      %42 = vector.shape_cast %41 : vector<128xf32> to vector<1x128xf32>
      %c0_19 = arith.constant 0 : index
      %c0_20 = arith.constant 0 : index
      %c0_21 = arith.constant 0 : index
      %43 = vector.load %arg4[%c0_19, %c0_20, %c0_21] : memref<1x1x128xf32, #tpu.memory_space<vmem>>, vector<1x1x128xf32>
      %44 = vector.shape_cast %43 : vector<1x1x128xf32> to vector<1x128xf32>
      %45 = vector.shape_cast %42 : vector<1x128xf32> to vector<1x1x128xf32>
      tpu.vector_store %arg4[%c0_19, %c0_20, %c0_21], %45 {strides = array<i32>} : memref<1x1x128xf32, #tpu.memory_space<vmem>>, vector<1x1x128xf32>,
    } else {
    }
    return
  }
  func.func @transform_0(%arg0: i32, %arg1: i32) -> (i32, i32) {
    %c1_i32 = arith.constant 1 : i32
    %0 = arith.muli %arg0, %c1_i32 : i32
    %1 = arith.addi %0, %arg1 : i32
    %c0_i32 = arith.constant 0 : i32
    %2 = arith.minsi %1, %c0_i32 : i32
    %c0_i32_0 = arith.constant 0 : i32
    %c0_i32_1 = arith.constant 0 : i32
    return %2, %c0_i32_0 : i32, i32
  }
  func.func @transform_1(%arg0: i32, %arg1: i32) -> (i32, i32) {
    %c1_i32 = arith.constant 1 : i32
    %0 = arith.muli %arg0, %c1_i32 : i32
    %1 = arith.addi %0, %arg1 : i32
    %c0_i32 = arith.constant 0 : i32
    %2 = arith.minsi %1, %c0_i32 : i32
    %c0_i32_0 = arith.constant 0 : i32
    %c0_i32_1 = arith.constant 0 : i32
    return %2, %c0_i32_0 : i32, i32
  }
  func.func @transform_2(%arg0: i32, %arg1: i32) -> (i32, i32, i32) {
    %c0_i32 = arith.constant 0 : i32
    %c0_i32_0 = arith.constant 0 : i32
    %c0_i32_1 = arith.constant 0 : i32
    return %arg0, %c0_i32, %c0_i32_0 : i32, i32, i32
  }
}

</mosaic_0001>

<llo_original>
// kernel: tpu_custom_call.1
$region0: #{tpu_custom_call.1}
  #allocation0 [shape = 'u32[]', space=smem, size = 0x4, offset = 0x4, fixed_abs, tag = 'smem constant byte address 0x4 - core index']
  #allocation1 [shape = 'u32[144,128]{1,0:T(1,128)}', space=vmem, size = 0x12000, scoped, tag = 'internal scratch']
  #allocation2 [shape = 'f32[8,128]{1,0:T(8,128)}', space=vmem, size = 0x1000, scoped, tag = 'scratch operand']
  %s0 = inlined_call_operand.hbm [shape: f32[8,128], index: 0, kind: input, shape index: {}]
  %s1 = inlined_call_operand.hbm [shape: f32[8,128], index: 1, kind: input, shape index: {}]
  %s2 = inlined_call_operand.hbm [shape: f32[1,1,128], index: 2, kind: output, shape index: {}]
  %s3 = sld [smem:[#allocation0]]
  $region34: #{tpu_custom_call.1} parent=0
    _
  %s5 = ssub.s32 1, %s3
  %s6 = scalar_select 0, %s5, %s3
  $region1: #{tpu_custom_call.1} parent=0
    #allocation3 [shape = 'u8[4096]{0}', space=vmem, size = 0x1000, scoped, tag = 'input window, operand 0, single buffered']
    #allocation4 [shape = 's32[1]{0}', space=sflag, size = 0x4, scoped, tag = 'scoped memory for tpu_custom_call.1']
    #allocation5 [shape = 's32[1]{0}', space=sflag, size = 0x4, scoped, tag = 'scoped memory for tpu_custom_call.1']
    #allocation6 [shape = 'u8[4096]{0}', space=vmem, size = 0x1000, scoped, tag = 'input window, operand 1, single buffered']
    #allocation7 [shape = 's32[1]{0}', space=sflag, size = 0x4, scoped, tag = 'scoped memory for tpu_custom_call.1']
    #allocation8 [shape = 'u8[512]{0}', space=vmem, size = 0x400, scoped, tag = 'output window, operand 0, single buffered']
    %7 = vsyncpa [#allocation4], 0
    %8 = vsyncpa [#allocation7], 0
    %9 = vsyncpa [#allocation5], 0
    // Predicated region
    $region2: #{tpu_custom_call.1} parent=1 // pred_check
      _
    $region3: #{tpu_custom_call.1} parent=1 // pred_check_branch
      %11 = sbr.rel (0) target = $region5
    $region4: #{tpu_custom_call.1} parent=1 // pred_region
      %s12 = sadd.s32 0, 0
      %p13 = scmp.lt.s32.totalorder %s12, 0
      %s14 = scalar_select %p13, %s12, 0
      %s16 = ssub.s32 128, 128
      %17 = vsyncadd [#allocation4], %s16
      %s18 = smul.addr %s14, 128
      %s19 = scalar_lea.hbm %s0, %s18
      %s21 = sshll.u32 [#allocation3], 4
      %s22 = int_to_ptr.vmem [resolvable:$true] %s21
      %24 = dma.hbm_to_vmem [thread:$0]  %s19, 128, %s22, [#allocation4]
    $region5: #{tpu_custom_call.1} parent=1 // pred_fallthru
      _
    // Predicated region
    $region6: #{tpu_custom_call.1} parent=1 // pred_check
      _
    $region7: #{tpu_custom_call.1} parent=1 // pred_check_branch
      %26 = sbr.rel (0) target = $region9
    $region8: #{tpu_custom_call.1} parent=1 // pred_region
      %s27 = sadd.s32 0, 0
      %p28 = scmp.lt.s32.totalorder %s27, 0
      %s29 = scalar_select %p28, %s27, 0
      %s31 = ssub.s32 128, 128
      %32 = vsyncadd [#allocation7], %s31
      %s33 = smul.addr %s29, 128
      %s34 = scalar_lea.hbm %s1, %s33
      %s36 = sshll.u32 [#allocation6], 4
      %s37 = int_to_ptr.vmem [resolvable:$true] %s36
      %39 = dma.hbm_to_vmem [thread:$0]  %s34, 128, %s37, [#allocation7]
    $region9: #{tpu_custom_call.1} parent=1 // pred_fallthru
      _
    // Predicated region
    $region10: #{tpu_custom_call.1} parent=1 // pred_check
      _
    $region11: #{tpu_custom_call.1} parent=1 // pred_check_branch
      %41 = sbr.rel (0) target = $region13
    $region12: #{tpu_custom_call.1} parent=1 // pred_region
      %42 = dma.done [#allocation4], 128
    $region13: #{tpu_custom_call.1} parent=1 // pred_fallthru
      _
    // Predicated region
    $region14: #{tpu_custom_call.1} parent=1 // pred_check
      _
    $region15: #{tpu_custom_call.1} parent=1 // pred_check_branch
      %44 = sbr.rel (0) target = $region17
    $region16: #{tpu_custom_call.1} parent=1 // pred_region
      %45 = dma.done [#allocation7], 128
    $region17: #{tpu_custom_call.1} parent=1 // pred_fallthru
      _
    %s46 = sadd.s32 0, 0
    %p47 = scmp.lt.s32.totalorder %s46, 0
    %s48 = scalar_select %p47, %s46, 0
    %s49 = sadd.s32 0, 0
    %p50 = scmp.lt.s32.totalorder %s49, 0
    %s51 = scalar_select %p50, %s49, 0
    %p52 = scmp.eq.s32.totalorder 0, 0
    // Predicated region
    $region18: #{tpu_custom_call.1} parent=1 // pred_check
      %p53 = pneg %p52
    $region19: #{tpu_custom_call.1} parent=1 // pred_check_branch
      %55 = sbr.rel (%p53) target = $region21
    $region20: #{tpu_custom_call.1} parent=1 // pred_region
      %56 = vst [vmem:[#allocation2] sm:$0xff] 0.0
    $region21: #{tpu_custom_call.1} parent=1 // pred_fallthru
      _
    %v57 = vld [vmem:[#allocation3] sm:$0xff]
    %v58 = vld [vmem:[#allocation6] sm:$0xff]
    %v59 = vmul.f32 %v57, %v58
    %v60 = vadd.f32 %v59, 1e-08
    %v61 = vrsqrt.pop %v60
    %v62 = vmul.f32 %v60, %v61
    %vm63 = vcmp.eq.f32.partialorder %v60, inf
    %v64 = vsel %vm63, %v60, %v62
    %vm65 = vcmp.eq.f32.partialorder %v60, 0.0
    %v66 = vand.u32 %v60, 2147483648
    %v67 = vsel %vm65, %v66, %v64
    %v68 = vsub.f32 1.0, %v57
    %v69 = vsub.f32 1.0, %v58
    %v70 = vmul.f32 %v68, %v69
    %v71 = vadd.f32 %v70, 1e-08
    %v72 = vrsqrt.pop %v71
    %v73 = vmul.f32 %v71, %v72
    %vm74 = vcmp.eq.f32.partialorder %v71, inf
    %v75 = vsel %vm74, %v71, %v73
    %vm76 = vcmp.eq.f32.partialorder %v71, 0.0
    %v77 = vand.u32 %v71, 2147483648
    %v78 = vsel %vm76, %v77, %v75
    %v79 = vadd.f32 %v67, %v78
    %v80 = vsub.f32 1.0, %v79
    %s81 = sadd.s32 0, 0
    %v82 = vlaneseq
    %v83 = vshrl.u32 %v82, 7
    %v84 = vlaneseq
    %v85 = vand.u32 %v84, 127
    %s86 = smul.u32 %s81, 8
    %v87 = vstv %s86
    %v88 = vadd.s32 %v87, %v83
    %v89 = vmul.u32 %v88, 128
    %v90 = vadd.s32 %v89, %v85
    %v91 = vld [vmem:[#allocation2] sm:$0xff]
    %vm92 = vcmp.lt.s32.totalorder %v90, 128
    %v93 = vsel %vm92, %v80, 0.0
    %v94 = vadd.f32 %v91, %v93
    %95 = vst [vmem:[#allocation2] sm:$0xff] %v94
    // Predicated region
    $region22: #{tpu_custom_call.1} parent=1 // pred_check
      %p96 = pneg %p52
    $region23: #{tpu_custom_call.1} parent=1 // pred_check_branch
      %98 = sbr.rel (%p96) target = $region25
    $region24: #{tpu_custom_call.1} parent=1 // pred_region
      %v99 = vld [vmem:[#allocation2] sm:$0xff]
      %v100 = vrot.slane %v99, 4
      %v101 = vadd.f32 %v99, %v100
      %v102 = vrot.slane %v101, 2
      %v103 = vadd.f32 %v101, %v102
      %v104 = vrot.slane %v103, 1
      %v105 = vadd.f32 %v103, %v104
      %106 = vst [vmem:[#allocation8] sm:$0x1] %v105
    $region25: #{tpu_custom_call.1} parent=1 // pred_fallthru
      _
    // Predicated region
    $region26: #{tpu_custom_call.1} parent=1 // pred_check
      _
    $region27: #{tpu_custom_call.1} parent=1 // pred_check_branch
      %108 = sbr.rel (0) target = $region29
    $region28: #{tpu_custom_call.1} parent=1 // pred_region
      %s110 = ssub.s32 16, 16
      %111 = vsyncadd [#allocation5], %s110
      %s113 = sshll.u32 [#allocation8], 4
      %s114 = int_to_ptr.vmem [resolvable:$true] %s113
      %116 = dma.vmem_to_hbm [thread:$0]  %s114, 16, %s2, [#allocation5]
    $region29: #{tpu_custom_call.1} parent=1 // pred_fallthru
      _
    // Predicated region
    $region30: #{tpu_custom_call.1} parent=1 // pred_check
      _
    $region31: #{tpu_custom_call.1} parent=1 // pred_check_branch
      %118 = sbr.rel (0) target = $region33
    $region32: #{tpu_custom_call.1} parent=1 // pred_region
      %119 = dma.done [#allocation5], 16
    $region33: #{tpu_custom_call.1} parent=1 // pred_fallthru
      _
    %120 = vsyncpa [#allocation4], 1
    %121 = vsyncpa [#allocation7], 1
    %122 = vsyncpa [#allocation5], 1

</llo_original>
